<compile_context>
chip_gen: v7x
topology: tpu7x:2x2x1
jax: 0.10.0
libtpu: 0.0.40
codegen_flags: <defaults>
</compile_context>

<pallas_src>
import math

import jax
import jax.numpy as jnp
from jax.experimental import pallas as pl
from jax.experimental.pallas import tpu as pltpu

_DEFAULT_ALPHA = 1e-06

_VMEM_BUDGET = 12 * 1024 * 1024   # conservative: fits v5e 16 MiB scoped default
_SINGLE_SHOT_MAX_D = 8192         # below this, reduce the whole row in one tile
_MAX_TILE_B = 512


def _round_up(x, m):
    return ((x + m - 1) // m) * m


def _pick_tile_b(B, max_rows):
    """Largest multiple-of-8 divisor of B that fits max_rows, preferring >= 2
    batch tiles (so both v7x TensorCores stream). Falls back to full B."""
    cands = [c for c in range(8, B + 1, 8) if B % c == 0 and c <= max_rows]
    if not cands:
        return B
    pref = [c for c in cands if B // c >= 2]
    return max(pref) if pref else max(cands)


def _make_single_kernel(alpha, d_valid, needs_mask):
    """1-D grid over batch tiles; whole (padded) row reduced in one shot."""
    c = 1.0 - 2.0 * alpha
    log_c = math.log(c)
    const_sum = float(d_valid) * log_c

    def kernel(x_ref, logpx_ref, y_ref, logpx_out_ref):
        x = x_ref[...].astype(jnp.float32)
        s = alpha + c * x
        log_s = jnp.log(s)                    # EUP
        log_1ms = jnp.log(1.0 - s)            # EUP
        y_ref[...] = (log_s - log_1ms).astype(y_ref.dtype)

        t = log_s + log_1ms                   # -logdetgrad + log_c, negated
        if needs_mask:
            lane = jax.lax.broadcasted_iota(jnp.int32, t.shape, dimension=1)
            contrib = jnp.where(lane < d_valid, log_c - t, 0.0)
            partial = jnp.sum(contrib, axis=-1, keepdims=True)
        else:
            partial = const_sum - jnp.sum(t, axis=-1, keepdims=True)
        logpx_out_ref[...] = logpx_ref[...] - partial

    return kernel


def _make_reduce_kernel(alpha, d_valid, tile_d, needs_mask):
    """2-D grid (batch, feature); feature axis reduced into a VMEM scratch."""
    c = 1.0 - 2.0 * alpha
    log_c = math.log(c)
    tile_const = float(tile_d) * log_c

    def kernel(x_ref, logpx_ref, y_ref, logpx_out_ref, acc_ref):
        k = pl.program_id(1)

        x = x_ref[...].astype(jnp.float32)
        s = alpha + c * x
        log_s = jnp.log(s)
        log_1ms = jnp.log(1.0 - s)
        y_ref[...] = (log_s - log_1ms).astype(y_ref.dtype)

        t = log_s + log_1ms
        if needs_mask:
            lane = k * tile_d + jax.lax.broadcasted_iota(
                jnp.int32, t.shape, dimension=1)
            contrib = jnp.where(lane < d_valid, log_c - t, 0.0)
            partial = jnp.sum(contrib, axis=-1, keepdims=True)
        else:
            partial = tile_const - jnp.sum(t, axis=-1, keepdims=True)

        @pl.when(k == 0)
        def _():
            acc_ref[...] = jnp.zeros_like(acc_ref)

        acc_ref[...] += partial

        @pl.when(k == pl.num_programs(1) - 1)
        def _():
            logpx_out_ref[...] = logpx_ref[...] - acc_ref[...]

    return kernel


def logit_transform_forward(x_nchw, logpx=None, alpha=_DEFAULT_ALPHA):
    """Forward pass of LogitTransform.

    x_nchw: (B, C, H, W) in (0, 1); logpx: (B, 1) or None.
    Returns y (same shape/dtype as x) and, if logpx is given, updated logpx.
    """
    B = x_nchw.shape[0]
    feat_shape = x_nchw.shape[1:]
    D = int(math.prod(feat_shape))
    x2d = x_nchw.reshape(B, D)                     # keep input dtype (no astype)
    y_dtype = x2d.dtype

    return_logpx = logpx is not None
    if logpx is None:
        logpx = jnp.zeros((B, 1), jnp.float32)
    logpx = logpx.astype(jnp.float32)

    # --- padding / masking for lane (128) alignment ------------------------
    D_pad = _round_up(D, 128)
    needs_mask = D_pad != D
    if needs_mask:
        # pad value 0.5 keeps log() finite; its logdet contribution is masked.
        x2d = jnp.pad(x2d, ((0, 0), (0, D_pad - D)), constant_values=0.5)

    io_bytes = 2 * jnp.dtype(y_dtype).itemsize     # x-in + y-out per element

    # --- tile selection against VMEM budget (double-buffered in + out) -----
    use_single = D_pad <= _SINGLE_SHOT_MAX_D
    if use_single:
        max_rows = max(8, _VMEM_BUDGET // (2 * D_pad * io_bytes))
        tile_b = _pick_tile_b(B, min(_MAX_TILE_B, max_rows))
        if 2 * tile_b * D_pad * io_bytes > _VMEM_BUDGET:
            use_single = False                     # odd-B fallback blew budget

    if use_single:
        tile_d = D_pad
        grid = (B // tile_b,)
        kernel = _make_single_kernel(float(alpha), D, needs_mask)
        in_specs = [
            pl.BlockSpec((tile_b, tile_d), lambda i: (i, 0)),
            pl.BlockSpec((tile_b, 1), lambda i: (i, 0)),
        ]
        out_specs = (
            pl.BlockSpec((tile_b, tile_d), lambda i: (i, 0)),
            pl.BlockSpec((tile_b, 1), lambda i: (i, 0)),
        )
        scratch_shapes = []
        dim_sem = ("parallel",)
    else:
        max_rows = min(_MAX_TILE_B,
                       max(8, _VMEM_BUDGET // (2 * 128 * io_bytes)))
        tile_b = _pick_tile_b(B, max_rows)
        tile_d = 128
        for cand in (4096, 2048, 1024, 512, 256):
            if D_pad % cand == 0 and 2 * tile_b * cand * io_bytes <= _VMEM_BUDGET:
                tile_d = cand
                break
        grid = (B // tile_b, D_pad // tile_d)
        kernel = _make_reduce_kernel(float(alpha), D, tile_d, needs_mask)
        in_specs = [
            pl.BlockSpec((tile_b, tile_d), lambda i, k: (i, k)),
            pl.BlockSpec((tile_b, 1), lambda i, k: (i, 0)),
        ]
        out_specs = (
            pl.BlockSpec((tile_b, tile_d), lambda i, k: (i, k)),
            pl.BlockSpec((tile_b, 1), lambda i, k: (i, 0)),
        )
        scratch_shapes = [pltpu.VMEM((tile_b, 1), jnp.float32)]
        dim_sem = ("parallel", "arbitrary")

    y2d, logpx_out = pl.pallas_call(
        kernel,
        out_shape=(
            jax.ShapeDtypeStruct((B, D_pad), y_dtype),
            jax.ShapeDtypeStruct((B, 1), jnp.float32),
        ),
        grid_spec=pltpu.PrefetchScalarGridSpec(
            num_scalar_prefetch=0,
            grid=grid,
            in_specs=in_specs,
            out_specs=out_specs,
            scratch_shapes=scratch_shapes,
        ),
        compiler_params=pltpu.CompilerParams(
            dimension_semantics=dim_sem,
        ),
    )(x2d, logpx)

    if needs_mask:
        y2d = y2d[:, :D]
    y = y2d.reshape((B,) + feat_shape)
    if return_logpx:
        return y, logpx_out
    return y


def _reference_forward(x_nchw, logpx, alpha=_DEFAULT_ALPHA):
    B = x_nchw.shape[0]
    x = x_nchw.reshape(B, -1).astype(jnp.float32)
    s = alpha + (1.0 - 2.0 * alpha) * x
    y = jnp.log(s) - jnp.log(1.0 - s)
    logdetgrad = -jnp.log(s - s * s) + math.log(1.0 - 2.0 * alpha)
    return (
        y.reshape(x_nchw.shape).astype(x_nchw.dtype),
        logpx - jnp.sum(logdetgrad, axis=1, keepdims=True),
    )


if __name__ == "__main__":
    # LogitTransform has no learnable parameters (alpha is a fixed hyperparam).
    key = jax.random.PRNGKey(0)
    kx, kp = jax.random.split(key)

    B, C, H, W = 2, 4, 16, 16
    # inputs in (0, 1) as expected by the logit preprocessing step
    x = jax.random.uniform(kx, (B, C, H, W), dtype=jnp.float32,
                           minval=0.01, maxval=0.99)
    logpx = jax.random.normal(kp, (B, 1), dtype=jnp.float32)

    y, logpx_out = logit_transform_forward(x, logpx, alpha=_DEFAULT_ALPHA)
    jax.block_until_ready((y, logpx_out))

    y_ref, logpx_ref = _reference_forward(x, logpx, alpha=_DEFAULT_ALPHA)
    assert jnp.allclose(y, y_ref, rtol=1e-5, atol=1e-5)
    assert jnp.allclose(logpx_out, logpx_ref, rtol=1e-4, atol=1e-3)

    # also exercise the logpx=None path (y only)
    y_only = logit_transform_forward(x, None, alpha=_DEFAULT_ALPHA)
    jax.block_until_ready(y_only)
    assert jnp.allclose(y_only, y_ref, rtol=1e-5, atol=1e-5)

    print("KERNEL_OK")
</pallas_src>

<mosaic_0001>
module attributes {stable_mosaic.version = 11 : i64} {
  func.func @kernel(%arg0: i32, %arg1: memref<2x1024xf32, #tpu.memory_space<vmem>>, %arg2: memref<2x1xf32, #tpu.memory_space<vmem>>, %arg3: memref<2x1024xf32, #tpu.memory_space<vmem>>, %arg4: memref<2x1xf32, #tpu.memory_space<vmem>>) attributes {dimension_semantics = [#tpu.dimension_semantics<parallel>], iteration_bounds = array<i64: 1>, scalar_prefetch = 0 : i64, scratch_operands = 0 : i64, tpu.core_type = #tpu.core_type<tc>, window_params = [{transform_indices = @transform_0, window_bounds = array<i64: 2, 1024>}, {transform_indices = @transform_1, window_bounds = array<i64: 2, 1>}, {transform_indices = @transform_2, window_bounds = array<i64: 2, 1024>}, {transform_indices = @transform_3, window_bounds = array<i64: 2, 1>}]} {
    %c0 = arith.constant 0 : index
    %c0_0 = arith.constant 0 : index
    %0 = vector.load %arg1[%c0, %c0_0] : memref<2x1024xf32, #tpu.memory_space<vmem>>, vector<2x1024xf32>
    %cst = arith.constant 0.999997973 : f32
    %1 = vector.broadcast %cst : f32 to vector<2x1024xf32>
    %2 = arith.mulf %1, %0 : vector<2x1024xf32>
    %cst_1 = arith.constant 9.99999997E-7 : f32
    %3 = vector.broadcast %cst_1 : f32 to vector<2x1024xf32>
    %4 = arith.addf %3, %2 : vector<2x1024xf32>
    %5 = math.log %4 : vector<2x1024xf32>
    %cst_2 = arith.constant 1.000000e+00 : f32
    %6 = vector.broadcast %cst_2 : f32 to vector<2x1024xf32>
    %7 = arith.subf %6, %4 : vector<2x1024xf32>
    %8 = math.log %7 : vector<2x1024xf32>
    %9 = arith.subf %5, %8 : vector<2x1024xf32>
    %c0_3 = arith.constant 0 : index
    %c0_4 = arith.constant 0 : index
    %10 = vector.load %arg3[%c0_3, %c0_4] : memref<2x1024xf32, #tpu.memory_space<vmem>>, vector<2x1024xf32>
    tpu.vector_store %arg3[%c0_3, %c0_4], %9 {strides = array<i32>} : memref<2x1024xf32, #tpu.memory_space<vmem>>, vector<2x1024xf32>,
    %11 = arith.addf %5, %8 : vector<2x1024xf32>
    %cst_5 = arith.constant dense<0.000000e+00> : vector<2xf32>
    %12 = vector.multi_reduction <add>, %11, %cst_5 [1] : vector<2x1024xf32> to vector<2xf32>
    %13 = vector.shape_cast %12 : vector<2xf32> to vector<2x1xf32>
    %cst_6 = arith.constant -0.00204800209 : f32
    %14 = vector.broadcast %cst_6 : f32 to vector<2x1xf32>
    %15 = arith.subf %14, %13 : vector<2x1xf32>
    %c0_7 = arith.constant 0 : index
    %c0_8 = arith.constant 0 : index
    %16 = vector.load %arg2[%c0_7, %c0_8] : memref<2x1xf32, #tpu.memory_space<vmem>>, vector<2x1xf32>
    %17 = arith.subf %16, %15 : vector<2x1xf32>
    %c0_9 = arith.constant 0 : index
    %c0_10 = arith.constant 0 : index
    %18 = vector.load %arg4[%c0_9, %c0_10] : memref<2x1xf32, #tpu.memory_space<vmem>>, vector<2x1xf32>
    tpu.vector_store %arg4[%c0_9, %c0_10], %17 {strides = array<i32>} : memref<2x1xf32, #tpu.memory_space<vmem>>, vector<2x1xf32>,
    return
  }
  func.func @transform_0(%arg0: i32) -> (i32, i32) {
    %c0_i32 = arith.constant 0 : i32
    %c0_i32_0 = arith.constant 0 : i32
    return %arg0, %c0_i32 : i32, i32
  }
  func.func @transform_1(%arg0: i32) -> (i32, i32) {
    %c0_i32 = arith.constant 0 : i32
    %c0_i32_0 = arith.constant 0 : i32
    return %arg0, %c0_i32 : i32, i32
  }
  func.func @transform_2(%arg0: i32) -> (i32, i32) {
    %c0_i32 = arith.constant 0 : i32
    %c0_i32_0 = arith.constant 0 : i32
    return %arg0, %c0_i32 : i32, i32
  }
  func.func @transform_3(%arg0: i32) -> (i32, i32) {
    %c0_i32 = arith.constant 0 : i32
    %c0_i32_0 = arith.constant 0 : i32
    return %arg0, %c0_i32 : i32, i32
  }
}

</mosaic_0001>

<llo_original>
// kernel: tpu_custom_call.1
$region0: #{tpu_custom_call.1}
  #allocation0 [shape = 'u32[]', space=smem, size = 0x4, offset = 0x4, fixed_abs, tag = 'smem constant byte address 0x4 - core index']
  #allocation1 [shape = 'u32[144,128]{1,0:T(1,128)}', space=vmem, size = 0x12000, scoped, tag = 'internal scratch']
  %s0 = inlined_call_operand.hbm [shape: f32[2,1024], index: 0, kind: input, shape index: {}]
  %s1 = inlined_call_operand.vmem [shape: f32[2,1], index: 1, kind: input, shape index: {}]
  %s2 = inlined_call_operand.hbm [shape: f32[2,1024], index: 2, kind: output, shape index: {0}]
  %s3 = inlined_call_operand.vmem [shape: f32[2,1], index: 3, kind: output, shape index: {1}]
  %4 = xla_tuple %s2, %s3
  %s5 = sld [smem:[#allocation0]]
  $region30: #{tpu_custom_call.1} parent=0
    _
  %s7 = ssub.s32 1, %s5
  %s8 = scalar_select 0, %s7, %s5
  $region1: #{tpu_custom_call.1} parent=0
    #allocation2 [shape = 'u8[8192]{0}', space=vmem, size = 0x2000, scoped, tag = 'input window, operand 0, single buffered']
    #allocation3 [shape = 's32[1]{0}', space=sflag, size = 0x4, scoped, tag = 'scoped memory for tpu_custom_call.1']
    #allocation4 [shape = 's32[1]{0}', space=sflag, size = 0x4, scoped, tag = 'scoped memory for tpu_custom_call.1']
    #allocation5 [shape = 'u8[8192]{0}', space=vmem, size = 0x2000, scoped, tag = 'output window, operand 0, single buffered']
    %9 = vsyncpa [#allocation3], 0
    %10 = vsyncpa [#allocation4], 0
    // Predicated region
    $region2: #{tpu_custom_call.1} parent=1 // pred_check
      _
    $region3: #{tpu_custom_call.1} parent=1 // pred_check_branch
      %12 = sbr.rel (0) target = $region5
    $region4: #{tpu_custom_call.1} parent=1 // pred_region
      %s14 = ssub.s32 256, 256
      %15 = vsyncadd [#allocation3], %s14
      %s17 = sshll.u32 [#allocation2], 4
      %s18 = int_to_ptr.vmem [resolvable:$true] %s17
      %20 = dma.hbm_to_vmem [thread:$0]  %s0, 256, %s18, [#allocation3]
    $region5: #{tpu_custom_call.1} parent=1 // pred_fallthru
      _
    // Predicated region
    $region6: #{tpu_custom_call.1} parent=1 // pred_check
      _
    $region7: #{tpu_custom_call.1} parent=1 // pred_check_branch
      %22 = sbr.rel (0) target = $region9
    $region8: #{tpu_custom_call.1} parent=1 // pred_region
      _
    $region9: #{tpu_custom_call.1} parent=1 // pred_fallthru
      _
    // Predicated region
    $region10: #{tpu_custom_call.1} parent=1 // pred_check
      _
    $region11: #{tpu_custom_call.1} parent=1 // pred_check_branch
      %24 = sbr.rel (0) target = $region13
    $region12: #{tpu_custom_call.1} parent=1 // pred_region
      %25 = dma.done [#allocation3], 256
    $region13: #{tpu_custom_call.1} parent=1 // pred_fallthru
      _
    %v26 = vld [vmem:[#allocation2] sm:$0xff]
    %v27 = vld [vmem:[#allocation2 + $0x8] sm:$0xff]
    %v28 = vmul.f32 %v26, 0.999998
    %v29 = vmul.f32 %v27, 0.999998
    %v30 = vadd.f32 %v28, 1e-06
    %v31 = vadd.f32 %v29, 1e-06
    %v32 = vlog2.pop %v30
    %v33 = vmul.f32 %v32, 0.6931472
    %v34 = vlog2.pop %v31
    %v35 = vmul.f32 %v34, 0.6931472
    %v36 = vsub.f32 1.0, %v30
    %v37 = vsub.f32 1.0, %v31
    %v38 = vlog2.pop %v36
    %v39 = vmul.f32 %v38, 0.6931472
    %v40 = vlog2.pop %v37
    %v41 = vmul.f32 %v40, 0.6931472
    %v42 = vsub.f32 %v33, %v39
    %v43 = vsub.f32 %v35, %v41
    %44 = vst [vmem:[#allocation5] sm:$0xff] %v42
    %45 = vst [vmem:[#allocation5 + $0x8] sm:$0xff] %v43
    %v46 = vadd.f32 %v33, %v39
    %v47 = vadd.f32 %v35, %v41
    %v50 = vcombine.high %v46, %v46
    %v52 = vunpack.c.l.s4 1983009808
    %v53 = vunpack.c.0.s8 %v52
    %v54 = vlaneseq
    %v55 = vshrl.u32 %v54, 7
    %v56 = vsub.s32 %v53, %v55
    %v57 = vrot.slane %v46, %v56
    %v59 = vunpack.c.l.s4 1983009808
    %v60 = vunpack.c.0.s8 %v59
    %v61 = vlaneseq
    %v62 = vshrl.u32 %v61, 7
    %v63 = vsub.s32 %v60, %v62
    %v64 = vrot.slane %v50, %v63
    %v65 = vcombine.high %v57, %v57
    %v66 = vcombine.high %v64, %v64
    %v67 = vcombine.high %v47, %v47
    %v69 = vunpack.c.l.s4 1983009808
    %v70 = vunpack.c.0.s8 %v69
    %v71 = vlaneseq
    %v72 = vshrl.u32 %v71, 7
    %v73 = vsub.s32 %v70, %v72
    %v74 = vrot.slane %v47, %v73
    %v76 = vunpack.c.l.s4 1983009808
    %v77 = vunpack.c.0.s8 %v76
    %v78 = vlaneseq
    %v79 = vshrl.u32 %v78, 7
    %v80 = vsub.s32 %v77, %v79
    %v81 = vrot.slane %v67, %v80
    %v82 = vcombine.high %v74, %v74
    %v83 = vcombine.high %v81, %v81
    %vm92 = vcmask 1041408
    %v93 = vsel %vm92, %v57, 0.0
    %v94 = vsel %vm92, %v65, 0.0
    %v95 = vadd.f32 %v93, %v94
    %v96 = vsel %vm92, %v64, 0.0
    %v97 = vadd.f32 %v95, %v96
    %v98 = vsel %vm92, %v66, 0.0
    %v99 = vadd.f32 %v97, %v98
    %v100 = vsel %vm92, %v74, 0.0
    %v101 = vadd.f32 %v99, %v100
    %v102 = vsel %vm92, %v82, 0.0
    %v103 = vadd.f32 %v101, %v102
    %v104 = vsel %vm92, %v81, 0.0
    %v105 = vadd.f32 %v103, %v104
    %v106 = vsel %vm92, %v83, 0.0
    %v107 = vadd.f32 %v105, %v106
    %108 = vadd.xlane.f32.xlu0 %v107
    %v109 = vpop.xlane.xlu0 %108
    %v110 = vsub.f32 -0.002048002, %v109
    %v111 = vld [vmem:[%s1] sm:$0x3]
    %v112 = vsub.f32 %v111, %v110
    %vm113 = vcmask 1024
    %114 = vst.msk [vmem:[%s3] sm:$0x3] %vm113, %v112
    // Predicated region
    $region14: #{tpu_custom_call.1} parent=1 // pred_check
      _
    $region15: #{tpu_custom_call.1} parent=1 // pred_check_branch
      %116 = sbr.rel (0) target = $region17
    $region16: #{tpu_custom_call.1} parent=1 // pred_region
      %s118 = ssub.s32 256, 256
      %119 = vsyncadd [#allocation4], %s118
      %s121 = sshll.u32 [#allocation5], 4
      %s122 = int_to_ptr.vmem [resolvable:$true] %s121
      %124 = dma.vmem_to_hbm [thread:$0]  %s122, 256, %s2, [#allocation4]
    $region17: #{tpu_custom_call.1} parent=1 // pred_fallthru
      _
    // Predicated region
    $region18: #{tpu_custom_call.1} parent=1 // pred_check
      _
    $region19: #{tpu_custom_call.1} parent=1 // pred_check_branch
      %126 = sbr.rel (0) target = $region21
    $region20: #{tpu_custom_call.1} parent=1 // pred_region
      _
    $region21: #{tpu_custom_call.1} parent=1 // pred_fallthru
      _
    // Predicated region
    $region22: #{tpu_custom_call.1} parent=1 // pred_check
      _
    $region23: #{tpu_custom_call.1} parent=1 // pred_check_branch
      %128 = sbr.rel (0) target = $region25
    $region24: #{tpu_custom_call.1} parent=1 // pred_region
      %129 = dma.done [#allocation4], 256
    $region25: #{tpu_custom_call.1} parent=1 // pred_fallthru
      _
    // Predicated region
    $region26: #{tpu_custom_call.1} parent=1 // pred_check
      _
    $region27: #{tpu_custom_call.1} parent=1 // pred_check_branch
      %131 = sbr.rel (0) target = $region29
    $region28: #{tpu_custom_call.1} parent=1 // pred_region
      _
    $region29: #{tpu_custom_call.1} parent=1 // pred_fallthru
      _
    %132 = vsyncpa [#allocation3], 1
    %133 = vsyncpa [#allocation4], 1

</llo_original>
